<compile_context>
chip_gen: v6e
topology: v6e:2x2x1
jax: 0.10.0
libtpu: 0.0.40
codegen_flags: <defaults>
</compile_context>

<pallas_src>
import jax
import jax.numpy as jnp
from jax.experimental import pallas as pl
from jax.experimental.pallas import tpu as pltpu


def _resnet_block_kernel(x_ref, w1_ref, w2r_ref, b1_ref, b2r_ref, o_ref):
    """Fused ResNetBlock for a block of `bt` batch elements.

    x_ref   : (bt, C_in, L)            input, MXU operand dtype
    w1_ref  : (C_out, K*C_in)          conv1 weight, taps stacked on contraction
    w2r_ref : (C_out, K*C_out + C_in)  [conv2 weight | 1x1 residual weight]
    b1_ref  : (C_out, 1)               conv1 bias (f32)
    b2r_ref : (C_out, 1)               conv2 bias + residual bias (f32)
    o_ref   : (1, C_out, bt*L)         lane-dense output slab
    """
    bt, c_in, L = x_ref.shape
    c_out = o_ref.shape[1]
    K = w1_ref.shape[1] // c_in
    P = (K - 1) // 2
    cdt = w1_ref.dtype                       # MXU operand dtype (bf16 / f32)

    w1 = w1_ref[...]
    w2r = w2r_ref[...]
    b1 = b1_ref[...]                         # (C_out, 1) broadcasts over lanes
    b2r = b2r_ref[...]

    # ---- replicate-pad x per batch element, entirely in registers.
    xpads = []
    for bi in range(bt):                     # tiny static unroll, no matmuls
        xb = x_ref[bi]                       # (C_in, L)
        left = jnp.broadcast_to(xb[:, :1], (c_in, P))
        right = jnp.broadcast_to(xb[:, L - 1:L], (c_in, P))
        xpads.append(jnp.concatenate([left, xb, right], axis=1))  # (C_in, L+2P)

    # ---- im2col for conv1: K taps stacked on the contraction (sublane) dim,
    #      batch elements packed along the lane dim.
    x_taps = [jnp.concatenate([xp[:, k:k + L] for xp in xpads], axis=1)
              for k in range(K)]             # K x (C_in, bt*L)
    xu = jnp.concatenate(x_taps, axis=0)     # (K*C_in, bt*L)

    # ---- conv1: ONE lane-dense MXU matmul (f32 acc) + bias + ReLU.
    h = jnp.dot(w1, xu, preferred_element_type=jnp.float32) + b1
    h = jnp.maximum(h, 0.0).astype(cdt)      # (C_out, bt*L)

    # ---- replicate-pad h per batch element and build the conv2 im2col.
    hpads = []
    for bi in range(bt):
        hb = h[:, bi * L:(bi + 1) * L]       # (C_out, L)
        left = jnp.broadcast_to(hb[:, :1], (c_out, P))
        right = jnp.broadcast_to(hb[:, L - 1:L], (c_out, P))
        hpads.append(jnp.concatenate([left, hb, right], axis=1))
    h_taps = [jnp.concatenate([hp[:, k:k + L] for hp in hpads], axis=1)
              for k in range(K)]             # K x (C_out, bt*L)

    # ---- conv2 + 1x1 residual fused into ONE matmul:
    #      [w2 | wr] @ [hu ; x_center], then fused (b2+br) bias and ReLU.
    rhs = jnp.concatenate(h_taps + [x_taps[P]], axis=0)  # (K*C_out+C_in, bt*L)
    yr = jnp.dot(w2r, rhs, preferred_element_type=jnp.float32) + b2r
    o_ref[0] = jnp.maximum(yr, 0.0).astype(o_ref.dtype)


def resnet_block_pallas(x, w1, b1, w2, b2, wr, br, *,
                        block_b=None, mxu_dtype=jnp.bfloat16,
                        out_dtype=jnp.float32):
    """x: (B, C_in, L) NCW float32. Weights in PyTorch OIW layout.

    block_b  : batch elements folded into one grid step (must divide B).
               Default: auto-pick the largest divisor of B with
               block_b*L <= 512 lanes (lane-dense matmul, amortized overhead).
    mxu_dtype: MXU operand dtype (bf16 default: all TPU generations have a
               bf16-native MXU; accumulation stays f32).
    out_dtype: output dtype (f32 default; pass bf16 to halve HBM writeback).
    """
    B, c_in, L = x.shape
    c_out, _, K = w1.shape

    if block_b is None:
        target = max(1, 512 // L)
        block_b = 1
        for d in range(1, B + 1):
            if B % d == 0 and d <= target:
                block_b = d
    assert B % block_b == 0, "block_b must divide the batch size"
    G = B // block_b

    # Flatten conv weights so the K taps lie along the contraction dim with
    # row order (k-major, channel-minor) matching the in-kernel im2col.
    w1_flat = jnp.transpose(w1, (0, 2, 1)).reshape(c_out, K * c_in)
    w2_flat = jnp.transpose(w2, (0, 2, 1)).reshape(c_out, K * c_out)
    wr_mat = wr[:, :, 0]                                    # (C_out, C_in)
    w2r = jnp.concatenate([w2_flat, wr_mat], axis=1)        # fused conv2|res

    x_m = x.astype(mxu_dtype)
    w1_m = w1_flat.astype(mxu_dtype)
    w2r_m = w2r.astype(mxu_dtype)
    b1_col = b1.reshape(c_out, 1).astype(jnp.float32)
    b2r_col = (b2 + br).reshape(c_out, 1).astype(jnp.float32)   # fused bias

    out_slab = pl.pallas_call(
        _resnet_block_kernel,
        out_shape=jax.ShapeDtypeStruct((G, c_out, block_b * L), out_dtype),
        grid_spec=pltpu.PrefetchScalarGridSpec(
            num_scalar_prefetch=0,
            grid=(G,),
            in_specs=[
                pl.BlockSpec((block_b, c_in, L), lambda g: (g, 0, 0)),     # x
                pl.BlockSpec((c_out, K * c_in), lambda g: (0, 0)),         # w1
                pl.BlockSpec((c_out, K * c_out + c_in), lambda g: (0, 0)),  # w2|wr
                pl.BlockSpec((c_out, 1), lambda g: (0, 0)),                # b1
                pl.BlockSpec((c_out, 1), lambda g: (0, 0)),                # b2+br
            ],
            out_specs=pl.BlockSpec((1, c_out, block_b * L),
                                   lambda g: (g, 0, 0)),
        ),
        compiler_params=pltpu.CompilerParams(
            dimension_semantics=("parallel",)),   # v7x: blocks across both TCs
    )(x_m, w1_m, w2r_m, b1_col, b2r_col)

    # Lane-packed (G, C_out, block_b*L) slab -> NCW (B, C_out, L).
    out = out_slab.reshape(G, c_out, block_b, L)
    out = jnp.transpose(out, (0, 2, 1, 3)).reshape(B, c_out, L)
    return out


# ------------------------- parameter init (deterministic) -------------------
def _xavier_uniform(key, shape):
    # shape = (out, in, k): fan_in = in*k, fan_out = out*k
    fan_in = shape[1] * shape[2]
    fan_out = shape[0] * shape[2]
    limit = (6.0 / (fan_in + fan_out)) ** 0.5
    return jax.random.uniform(key, shape, jnp.float32, -limit, limit)


def _conv_bias(key, shape_w):
    fan_in = shape_w[1] * shape_w[2]
    bound = 1.0 / (fan_in ** 0.5)
    return jax.random.uniform(key, (shape_w[0],), jnp.float32, -bound, bound)


def make_params(key, c_in, c_out, k=5):
    ks = jax.random.split(key, 6)
    w1 = _xavier_uniform(ks[0], (c_out, c_in, k))
    b1 = _conv_bias(ks[1], (c_out, c_in, k))
    w2 = _xavier_uniform(ks[2], (c_out, c_out, k))
    b2 = _conv_bias(ks[3], (c_out, c_out, k))
    wr = _xavier_uniform(ks[4], (c_out, c_in, 1))
    br = _conv_bias(ks[5], (c_out, c_in, 1))
    # TODO(synk): nn.utils.weight_norm is a training-time reparameterization
    # (g * v/||v||); the forward pass is modeled with the effective weight.
    return w1, b1, w2, b2, wr, br


# ------------------------------ pure-JAX reference ---------------------------
def resnet_block_ref(x, w1, b1, w2, b2, wr, br):
    def conv(z, w, b, pad):
        if pad > 0:
            z = jnp.pad(z, ((0, 0), (0, 0), (pad, pad)), mode='edge')
        y = jax.lax.conv_general_dilated(
            z, w, (1,), 'VALID', dimension_numbers=('NCW', 'OIW', 'NCW'))
        return y + b[None, :, None]

    h = jax.nn.relu(conv(x, w1, b1, 2))
    y = conv(h, w2, b2, 2)
    r = conv(x, wr, br, 0)
    return jax.nn.relu(y + r)


if __name__ == "__main__":
    key = jax.random.PRNGKey(0)
    k_x, k_p = jax.random.split(key)

    B, C_IN, C_OUT, L = 2, 4, 8, 16
    x = jax.random.normal(k_x, (B, C_IN, L), jnp.float32)
    params = make_params(k_p, C_IN, C_OUT, k=5)

    ref = jax.block_until_ready(resnet_block_ref(x, *params))

    # f32 MXU path, one batch element per (parallel) grid step (2 grid steps
    # -> both v7x TensorCores busy).
    out = jax.block_until_ready(
        resnet_block_pallas(x, *params, block_b=1, mxu_dtype=jnp.float32))
    assert out.shape == (B, C_OUT, L)
    assert jnp.allclose(out, ref, atol=1e-4, rtol=1e-4), (
        float(jnp.max(jnp.abs(out - ref))))

    # f32 MXU path, auto block_b (whole batch lane-packed into one wide slab).
    out_b = jax.block_until_ready(
        resnet_block_pallas(x, *params, mxu_dtype=jnp.float32))
    assert jnp.allclose(out_b, ref, atol=1e-4, rtol=1e-4), (
        float(jnp.max(jnp.abs(out_b - ref))))

    # bf16 MXU operands (default), f32 accumulation -> looser tolerance.
    out_bf16 = jax.block_until_ready(resnet_block_pallas(x, *params))
    assert jnp.allclose(out_bf16, ref, atol=5e-2, rtol=5e-2), (
        float(jnp.max(jnp.abs(out_bf16 - ref))))

    print("KERNEL_OK")
</pallas_src>

<mosaic_0001>
module attributes {stable_mosaic.version = 11 : i64} {
  func.func @_resnet_block_kernel(%arg0: i32, %arg1: memref<1x4x16xf32, #tpu.memory_space<vmem>>, %arg2: memref<8x20xf32, #tpu.memory_space<vmem>>, %arg3: memref<8x44xf32, #tpu.memory_space<vmem>>, %arg4: memref<8x1xf32, #tpu.memory_space<vmem>>, %arg5: memref<8x1xf32, #tpu.memory_space<vmem>>, %arg6: memref<1x8x16xf32, #tpu.memory_space<vmem>>) attributes {dimension_semantics = [#tpu.dimension_semantics<parallel>], iteration_bounds = array<i64: 2>, scalar_prefetch = 0 : i64, scratch_operands = 0 : i64, tpu.core_type = #tpu.core_type<tc>, window_params = [{transform_indices = @transform_0, window_bounds = array<i64: 1, 4, 16>}, {pipeline_mode = #tpu.pipeline_mode<synchronous>, transform_indices = @transform_1, window_bounds = array<i64: 8, 20>}, {pipeline_mode = #tpu.pipeline_mode<synchronous>, transform_indices = @transform_2, window_bounds = array<i64: 8, 44>}, {pipeline_mode = #tpu.pipeline_mode<synchronous>, transform_indices = @transform_3, window_bounds = array<i64: 8, 1>}, {pipeline_mode = #tpu.pipeline_mode<synchronous>, transform_indices = @transform_4, window_bounds = array<i64: 8, 1>}, {transform_indices = @transform_5, window_bounds = array<i64: 1, 8, 16>}]} {
    %c0 = arith.constant 0 : index
    %c0_0 = arith.constant 0 : index
    %0 = vector.load %arg2[%c0, %c0_0] : memref<8x20xf32, #tpu.memory_space<vmem>>, vector<8x20xf32>
    %c0_1 = arith.constant 0 : index
    %c0_2 = arith.constant 0 : index
    %1 = vector.load %arg3[%c0_1, %c0_2] : memref<8x44xf32, #tpu.memory_space<vmem>>, vector<8x44xf32>
    %c0_3 = arith.constant 0 : index
    %c0_4 = arith.constant 0 : index
    %2 = vector.load %arg4[%c0_3, %c0_4] : memref<8x1xf32, #tpu.memory_space<vmem>>, vector<8x1xf32>
    %c0_5 = arith.constant 0 : index
    %c0_6 = arith.constant 0 : index
    %3 = vector.load %arg5[%c0_5, %c0_6] : memref<8x1xf32, #tpu.memory_space<vmem>>, vector<8x1xf32>
    %c0_7 = arith.constant 0 : index
    %c0_8 = arith.constant 0 : index
    %c0_9 = arith.constant 0 : index
    %4 = vector.load %arg1[%c0_7, %c0_8, %c0_9] : memref<1x4x16xf32, #tpu.memory_space<vmem>>, vector<1x4x16xf32>
    %5 = vector.shape_cast %4 : vector<1x4x16xf32> to vector<4x16xf32>
    %6 = vector.extract_strided_slice %5 {offsets = [0, 0], sizes = [4, 1], strides = [1, 1]} : vector<4x16xf32> to vector<4x1xf32>
    %7 = vector.shape_cast %6 : vector<4x1xf32> to vector<4x1xf32>
    %8 = vector.broadcast %7 : vector<4x1xf32> to vector<4x2xf32>
    %9 = vector.extract_strided_slice %5 {offsets = [0, 15], sizes = [4, 1], strides = [1, 1]} : vector<4x16xf32> to vector<4x1xf32>
    %10 = vector.shape_cast %9 : vector<4x1xf32> to vector<4x1xf32>
    %11 = vector.broadcast %10 : vector<4x1xf32> to vector<4x2xf32>
    %12 = tpu.concatenate %8, %5, %11 in 1 : vector<4x2xf32>, vector<4x16xf32>, vector<4x2xf32> -> vector<4x20xf32>
    %13 = vector.extract_strided_slice %12 {offsets = [0, 0], sizes = [4, 16], strides = [1, 1]} : vector<4x20xf32> to vector<4x16xf32>
    %14 = vector.extract_strided_slice %12 {offsets = [0, 1], sizes = [4, 16], strides = [1, 1]} : vector<4x20xf32> to vector<4x16xf32>
    %15 = vector.extract_strided_slice %12 {offsets = [0, 2], sizes = [4, 16], strides = [1, 1]} : vector<4x20xf32> to vector<4x16xf32>
    %16 = vector.extract_strided_slice %12 {offsets = [0, 3], sizes = [4, 16], strides = [1, 1]} : vector<4x20xf32> to vector<4x16xf32>
    %17 = vector.extract_strided_slice %12 {offsets = [0, 4], sizes = [4, 16], strides = [1, 1]} : vector<4x20xf32> to vector<4x16xf32>
    %18 = tpu.concatenate %13, %14, %15, %16, %17 in 0 : vector<4x16xf32>, vector<4x16xf32>, vector<4x16xf32>, vector<4x16xf32>, vector<4x16xf32> -> vector<20x16xf32>
    %cst = arith.constant dense<0.000000e+00> : vector<8x16xf32>
    %19 = tpu.matmul %0, %18, %cst {dimension_numbers = #tpu.dot_dimension_numbers<[1], [0], [0], [1], [0, 0, 1, 1], [], []>} : vector<8x20xf32>, vector<20x16xf32>, vector<8x16xf32> -> vector<8x16xf32>
    %20 = vector.broadcast %2 : vector<8x1xf32> to vector<8x16xf32>
    %21 = arith.addf %19, %20 : vector<8x16xf32>
    %cst_10 = arith.constant 0.000000e+00 : f32
    %22 = vector.broadcast %cst_10 : f32 to vector<8x16xf32>
    %23 = arith.maximumf %21, %22 : vector<8x16xf32>
    %24 = vector.extract_strided_slice %23 {offsets = [0, 0], sizes = [8, 1], strides = [1, 1]} : vector<8x16xf32> to vector<8x1xf32>
    %25 = vector.shape_cast %24 : vector<8x1xf32> to vector<8x1xf32>
    %26 = vector.broadcast %25 : vector<8x1xf32> to vector<8x2xf32>
    %27 = vector.extract_strided_slice %23 {offsets = [0, 15], sizes = [8, 1], strides = [1, 1]} : vector<8x16xf32> to vector<8x1xf32>
    %28 = vector.shape_cast %27 : vector<8x1xf32> to vector<8x1xf32>
    %29 = vector.broadcast %28 : vector<8x1xf32> to vector<8x2xf32>
    %30 = tpu.concatenate %26, %23, %29 in 1 : vector<8x2xf32>, vector<8x16xf32>, vector<8x2xf32> -> vector<8x20xf32>
    %31 = vector.extract_strided_slice %30 {offsets = [0, 0], sizes = [8, 16], strides = [1, 1]} : vector<8x20xf32> to vector<8x16xf32>
    %32 = vector.extract_strided_slice %30 {offsets = [0, 1], sizes = [8, 16], strides = [1, 1]} : vector<8x20xf32> to vector<8x16xf32>
    %33 = vector.extract_strided_slice %30 {offsets = [0, 2], sizes = [8, 16], strides = [1, 1]} : vector<8x20xf32> to vector<8x16xf32>
    %34 = vector.extract_strided_slice %30 {offsets = [0, 3], sizes = [8, 16], strides = [1, 1]} : vector<8x20xf32> to vector<8x16xf32>
    %35 = vector.extract_strided_slice %30 {offsets = [0, 4], sizes = [8, 16], strides = [1, 1]} : vector<8x20xf32> to vector<8x16xf32>
    %36 = tpu.concatenate %31, %32, %33, %34, %35, %15 in 0 : vector<8x16xf32>, vector<8x16xf32>, vector<8x16xf32>, vector<8x16xf32>, vector<8x16xf32>, vector<4x16xf32> -> vector<44x16xf32>
    %cst_11 = arith.constant dense<0.000000e+00> : vector<8x16xf32>
    %37 = tpu.matmul %1, %36, %cst_11 {dimension_numbers = #tpu.dot_dimension_numbers<[1], [0], [0], [1], [0, 0, 1, 1], [], []>} : vector<8x44xf32>, vector<44x16xf32>, vector<8x16xf32> -> vector<8x16xf32>
    %38 = vector.broadcast %3 : vector<8x1xf32> to vector<8x16xf32>
    %39 = arith.addf %37, %38 : vector<8x16xf32>
    %cst_12 = arith.constant 0.000000e+00 : f32
    %40 = vector.broadcast %cst_12 : f32 to vector<8x16xf32>
    %41 = arith.maximumf %39, %40 : vector<8x16xf32>
    %c0_13 = arith.constant 0 : index
    %c0_14 = arith.constant 0 : index
    %c0_15 = arith.constant 0 : index
    %42 = vector.load %arg6[%c0_13, %c0_14, %c0_15] : memref<1x8x16xf32, #tpu.memory_space<vmem>>, vector<1x8x16xf32>
    %43 = vector.shape_cast %42 : vector<1x8x16xf32> to vector<8x16xf32>
    %44 = vector.shape_cast %41 : vector<8x16xf32> to vector<1x8x16xf32>
    tpu.vector_store %arg6[%c0_13, %c0_14, %c0_15], %44 {strides = array<i32>} : memref<1x8x16xf32, #tpu.memory_space<vmem>>, vector<1x8x16xf32>,
    return
  }
  func.func @transform_0(%arg0: i32) -> (i32, i32, i32) {
    %c0_i32 = arith.constant 0 : i32
    %c0_i32_0 = arith.constant 0 : i32
    %c0_i32_1 = arith.constant 0 : i32
    return %arg0, %c0_i32, %c0_i32_0 : i32, i32, i32
  }
  func.func @transform_1(%arg0: i32) -> (i32, i32) {
    %c0_i32 = arith.constant 0 : i32
    %c0_i32_0 = arith.constant 0 : i32
    %c0_i32_1 = arith.constant 0 : i32
    return %c0_i32, %c0_i32_0 : i32, i32
  }
  func.func @transform_2(%arg0: i32) -> (i32, i32) {
    %c0_i32 = arith.constant 0 : i32
    %c0_i32_0 = arith.constant 0 : i32
    %c0_i32_1 = arith.constant 0 : i32
    return %c0_i32, %c0_i32_0 : i32, i32
  }
  func.func @transform_3(%arg0: i32) -> (i32, i32) {
    %c0_i32 = arith.constant 0 : i32
    %c0_i32_0 = arith.constant 0 : i32
    %c0_i32_1 = arith.constant 0 : i32
    return %c0_i32, %c0_i32_0 : i32, i32
  }
  func.func @transform_4(%arg0: i32) -> (i32, i32) {
    %c0_i32 = arith.constant 0 : i32
    %c0_i32_0 = arith.constant 0 : i32
    %c0_i32_1 = arith.constant 0 : i32
    return %c0_i32, %c0_i32_0 : i32, i32
  }
  func.func @transform_5(%arg0: i32) -> (i32, i32, i32) {
    %c0_i32 = arith.constant 0 : i32
    %c0_i32_0 = arith.constant 0 : i32
    %c0_i32_1 = arith.constant 0 : i32
    return %arg0, %c0_i32, %c0_i32_0 : i32, i32, i32
  }
}

</mosaic_0001>

<llo_original>
// kernel: tpu_custom_call.1
$region0: #{tpu_custom_call.1}
  #allocation0 [shape = 'u32[]', space=smem, size = 0x4, offset = 0x4, fixed_abs, tag = 'smem constant byte address 0x4 - core index']
  #allocation1 [shape = 'u32[144,128]{1,0:T(1,128)}', space=vmem, size = 0x12000, scoped, tag = 'internal scratch']
  %s0 = inlined_call_operand.vmem [shape: f32[2,4,16], index: 0, kind: input, shape index: {}]
  %s1 = inlined_call_operand.vmem [shape: f32[8,20], index: 1, kind: input, shape index: {}]
  %s2 = inlined_call_operand.hbm [shape: f32[8,44], index: 2, kind: input, shape index: {}]
  %s3 = inlined_call_operand.vmem [shape: f32[8,1], index: 3, kind: input, shape index: {}]
  %s4 = inlined_call_operand.vmem [shape: f32[8,1], index: 4, kind: input, shape index: {}]
  %s5 = inlined_call_operand.hbm [shape: f32[2,8,16], index: 5, kind: output, shape index: {}]
  %s6 = sld [smem:[#allocation0]]
  $region57: #{tpu_custom_call.1} parent=0
    _
  %s8 = ssub.s32 1, %s6
  %s9 = scalar_select 0, %s8, %s6
  $region1: #{tpu_custom_call.1} parent=0
    #allocation2 [shape = 'u8[4096]{0}', space=vmem, size = 0x1000, scoped, tag = 'input window, operand 2, single buffered']
    #allocation3 [shape = 's32[2]{0}', space=sflag, size = 0x8, scoped, tag = 'scoped memory for tpu_custom_call.1']
    #allocation4 [shape = 's32[2]{0}', space=sflag, size = 0x8, scoped, tag = 'scoped memory for tpu_custom_call.1']
    #allocation5 [shape = 'u8[8192]{0}', space=vmem, size = 0x2000, scoped, tag = 'output window, operand 0']
    %10 = vsyncpa [#allocation3], 0
    %11 = vsyncpa [#allocation4], 0
    %s12 = scalar_lea.sflag [#allocation4], 1
    %13 = vsyncpa %s12, 0
    loop: start=0, step=1, limit=4
    $region2: #{tpu_custom_call.1} parent=1 // loop_pre_header
      _
    $region3: #{tpu_custom_call.1} parent=1 // loop_header
      %s15 = sphi 0, %s19
      %p16 = scmp.ge.s32.totalorder %s15, 4
      %s25 = sphi 0, %s27
      %s28 = sphi 0, %s25
      %s29 = sphi 0, %s28
      %s45 = sphi 0, %s29
      %s49 = sphi 0, %s49
      %s51 = sphi 0, %s49
      %s52 = sphi 0, %s51
      %s66 = sphi 0, %s52
      %s70 = sphi 0, %s70
      %s72 = sphi 0, %s70
      %s73 = sphi 0, %s72
      %s87 = sphi 0, %s73
      %s91 = sphi 0, %s91
      %s93 = sphi 0, %s91
      %s94 = sphi 0, %s93
      %s108 = sphi 0, %s94
      %s112 = sphi 0, %s112
      %s114 = sphi 0, %s112
      %s115 = sphi 0, %s114
      %s129 = sphi 0, %s115
      %s135 = sphi 0, %s137
      %s138 = sphi 0, %s135
      %s139 = sphi 0, %s138
      %s155 = sphi 0, %s139
    $region4: #{tpu_custom_call.1} parent=1 // loop_header_branch
      %18 = sbr.rel (%p16) target = $region8
    $region5: #{tpu_custom_call.1} parent=1 // loop_body
      %s20 = ssub.s32 %s15, 1
      %s21 = ssub.s32 %s15, 2
      %s22 = sadd.s32 %s15, 1
      %s23 = ssub.s32 %s15, %s22
      %p24 = scmp.eq.s32.totalorder %s23, 0
      %s26 = sadd.s32 %s25, 1
      %s27 = scalar_select %p24, %s25, %s26
      %p30 = pneg %p24
      %p31 = scmp.eq.s32.totalorder %s15, 1
      %p32 = por %p30, %p31
      %p33 = scmp.ne.s32.totalorder %s25, %s28
      %p34 = scmp.eq.s32.totalorder %s15, 0
      %p35 = por %p33, %p34
      %p36 = scmp.ne.s32.totalorder %s25, %s28
      %p37 = scmp.eq.s32.totalorder %s20, 1
      %p38 = por %p36, %p37
      %p39 = scmp.ne.s32.totalorder %s28, %s29
      %p40 = scmp.eq.s32.totalorder %s20, 0
      %p41 = por %p39, %p40
      %p42 = scmp.ne.s32.totalorder %s28, %s29
      %p43 = scmp.eq.s32.totalorder %s21, 1
      %p44 = por %p42, %p43
      %p46 = scmp.ne.s32.totalorder %s29, %s45
      %p47 = scmp.eq.s32.totalorder %s21, 0
      %p48 = por %p46, %p47
      %s50 = sadd.s32 %s49, 1
      %p53 = scmp.eq.s32.totalorder %s15, 1
      %p54 = scmp.ne.s32.totalorder %s49, %s51
      %p55 = scmp.eq.s32.totalorder %s15, 0
      %p56 = por %p54, %p55
      %p57 = scmp.ne.s32.totalorder %s49, %s51
      %p58 = scmp.eq.s32.totalorder %s20, 1
      %p59 = por %p57, %p58
      %p60 = scmp.ne.s32.totalorder %s51, %s52
      %p61 = scmp.eq.s32.totalorder %s20, 0
      %p62 = por %p60, %p61
      %p63 = scmp.ne.s32.totalorder %s51, %s52
      %p64 = scmp.eq.s32.totalorder %s21, 1
      %p65 = por %p63, %p64
      %p67 = scmp.ne.s32.totalorder %s52, %s66
      %p68 = scmp.eq.s32.totalorder %s21, 0
      %p69 = por %p67, %p68
      %s71 = sadd.s32 %s70, 1
      %p74 = scmp.eq.s32.totalorder %s15, 1
      %p75 = scmp.ne.s32.totalorder %s70, %s72
      %p76 = scmp.eq.s32.totalorder %s15, 0
      %p77 = por %p75, %p76
      %p78 = scmp.ne.s32.totalorder %s70, %s72
      %p79 = scmp.eq.s32.totalorder %s20, 1
      %p80 = por %p78, %p79
      %p81 = scmp.ne.s32.totalorder %s72, %s73
      %p82 = scmp.eq.s32.totalorder %s20, 0
      %p83 = por %p81, %p82
      %p84 = scmp.ne.s32.totalorder %s72, %s73
      %p85 = scmp.eq.s32.totalorder %s21, 1
      %p86 = por %p84, %p85
      %p88 = scmp.ne.s32.totalorder %s73, %s87
      %p89 = scmp.eq.s32.totalorder %s21, 0
      %p90 = por %p88, %p89
      %s92 = sadd.s32 %s91, 1
      %p95 = scmp.eq.s32.totalorder %s15, 1
      %p96 = scmp.ne.s32.totalorder %s91, %s93
      %p97 = scmp.eq.s32.totalorder %s15, 0
      %p98 = por %p96, %p97
      %p99 = scmp.ne.s32.totalorder %s91, %s93
      %p100 = scmp.eq.s32.totalorder %s20, 1
      %p101 = por %p99, %p100
      %p102 = scmp.ne.s32.totalorder %s93, %s94
      %p103 = scmp.eq.s32.totalorder %s20, 0
      %p104 = por %p102, %p103
      %p105 = scmp.ne.s32.totalorder %s93, %s94
      %p106 = scmp.eq.s32.totalorder %s21, 1
      %p107 = por %p105, %p106
      %p109 = scmp.ne.s32.totalorder %s94, %s108
      %p110 = scmp.eq.s32.totalorder %s21, 0
      %p111 = por %p109, %p110
      %s113 = sadd.s32 %s112, 1
      %p116 = scmp.eq.s32.totalorder %s15, 1
      %p117 = scmp.ne.s32.totalorder %s112, %s114
      %p118 = scmp.eq.s32.totalorder %s15, 0
      %p119 = por %p117, %p118
      %p120 = scmp.ne.s32.totalorder %s112, %s114
      %p121 = scmp.eq.s32.totalorder %s20, 1
      %p122 = por %p120, %p121
      %p123 = scmp.ne.s32.totalorder %s114, %s115
      %p124 = scmp.eq.s32.totalorder %s20, 0
      %p125 = por %p123, %p124
      %p126 = scmp.ne.s32.totalorder %s114, %s115
      %p127 = scmp.eq.s32.totalorder %s21, 1
      %p128 = por %p126, %p127
      %p130 = scmp.ne.s32.totalorder %s115, %s129
      %p131 = scmp.eq.s32.totalorder %s21, 0
      %p132 = por %p130, %p131
      %s133 = ssub.s32 %s15, %s22
      %p134 = scmp.eq.s32.totalorder %s133, 0
      %s136 = sadd.s32 %s135, 1
      %s137 = scalar_select %p134, %s135, %s136
      %p140 = pneg %p134
      %p141 = scmp.eq.s32.totalorder %s15, 1
      %p142 = por %p140, %p141
      %p143 = scmp.ne.s32.totalorder %s135, %s138
      %p144 = scmp.eq.s32.totalorder %s15, 0
      %p145 = por %p143, %p144
      %p146 = scmp.ne.s32.totalorder %s135, %s138
      %p147 = scmp.eq.s32.totalorder %s20, 1
      %p148 = por %p146, %p147
      %p149 = scmp.ne.s32.totalorder %s138, %s139
      %p150 = scmp.eq.s32.totalorder %s20, 0
      %p151 = por %p149, %p150
      %p152 = scmp.ne.s32.totalorder %s138, %s139
      %p153 = scmp.eq.s32.totalorder %s21, 1
      %p154 = por %p152, %p153
      %p156 = scmp.ne.s32.totalorder %s139, %s155
      %p157 = scmp.eq.s32.totalorder %s21, 0
      %p158 = por %p156, %p157
      %p159 = scmp.le.s32.totalorder 1, %s15
      %p160 = scmp.lt.s32.totalorder %s15, 3
      %p161 = pnand %p159, %p160
      %p162 = pneg %p161
      // Predicated region
      $region9: #{tpu_custom_call.1} parent=5 // pred_check
        _
      $region10: #{tpu_custom_call.1} parent=5 // pred_check_branch
        %164 = sbr.rel (%p161) target = $region12
      $region11: #{tpu_custom_call.1} parent=5 // pred_region
        %s165 = ssub.s32 %s15, 1
        // Predicated region
        $region13: #{tpu_custom_call.1} parent=11 // pred_check
          %p166 = pneg %p62
        $region14: #{tpu_custom_call.1} parent=11 // pred_check_branch
          %168 = sbr.rel (%p166) target = $region16
        $region15: #{tpu_custom_call.1} parent=11 // pred_region
          _
        $region16: #{tpu_custom_call.1} parent=11 // pred_fallthru
          _
        // Predicated region
        $region17: #{tpu_custom_call.1} parent=11 // pred_check
          %p169 = pneg %p83
        $region18: #{tpu_custom_call.1} parent=11 // pred_check_branch
          %171 = sbr.rel (%p169) target = $region20
        $region19: #{tpu_custom_call.1} parent=11 // pred_region
          %s173 = ssub.s32 128, 128
          %174 = vsyncadd [#allocation3], %s173
          %s176 = sshll.u32 [#allocation2], 4
          %s177 = int_to_ptr.vmem [resolvable:$true] %s176
          %179 = dma.hbm_to_vmem [thread:$0]  %s2, 128, %s177, [#allocation3]
        $region20: #{tpu_custom_call.1} parent=11 // pred_fallthru
          _
        // Predicated region
        $region21: #{tpu_custom_call.1} parent=11 // pred_check
          %p180 = pneg %p104
        $region22: #{tpu_custom_call.1} parent=11 // pred_check_branch
          %182 = sbr.rel (%p180) target = $region24
        $region23: #{tpu_custom_call.1} parent=11 // pred_region
          _
        $region24: #{tpu_custom_call.1} parent=11 // pred_fallthru
          _
        // Predicated region
        $region25: #{tpu_custom_call.1} parent=11 // pred_check
          %p183 = pneg %p125
        $region26: #{tpu_custom_call.1} parent=11 // pred_check_branch
          %185 = sbr.rel (%p183) target = $region28
        $region27: #{tpu_custom_call.1} parent=11 // pred_region
          _
        $region28: #{tpu_custom_call.1} parent=11 // pred_fallthru
          _
      $region12: #{tpu_custom_call.1} parent=5 // pred_fallthru
        _
      %p186 = scmp.lt.s32.totalorder %s15, 2
      // Predicated region
      $region29: #{tpu_custom_call.1} parent=5 // pred_check
        %p187 = pneg %p186
      $region30: #{tpu_custom_call.1} parent=5 // pred_check_branch
        %189 = sbr.rel (%p187) target = $region32
      $region31: #{tpu_custom_call.1} parent=5 // pred_region
        // Predicated region
        $region33: #{tpu_custom_call.1} parent=31 // pred_check
          %p190 = pneg %p35
        $region34: #{tpu_custom_call.1} parent=31 // pred_check_branch
          %192 = sbr.rel (%p190) target = $region36
        $region35: #{tpu_custom_call.1} parent=31 // pred_region
          %p193 = scmp.lt.s32.totalorder %s15, 1
          %s194 = scalar_select %p193, %s15, 1
          %s195 = smul.addr %s194, 4
          %s196 = scalar_lea.vmem %s0, %s195
        $region36: #{tpu_custom_call.1} parent=31 // pred_fallthru
          _
      $region32: #{tpu_custom_call.1} parent=5 // pred_fallthru
        _
      %p197 = scmp.le.s32.totalorder 1, %s15
      %p198 = scmp.lt.s32.totalorder %s15, 3
      %p199 = pnand %p197, %p198
      %p200 = pneg %p199
      // Predicated region
      $region37: #{tpu_custom_call.1} parent=5 // pred_check
        _
      $region38: #{tpu_custom_call.1} parent=5 // pred_check_branch
        %202 = sbr.rel (%p199) target = $region40
      $region39: #{tpu_custom_call.1} parent=5 // pred_region
        %s203 = ssub.s32 %s15, 1
        // Predicated region
        $region41: #{tpu_custom_call.1} parent=39 // pred_check
          %p204 = pneg %p83
        $region42: #{tpu_custom_call.1} parent=39 // pred_check_branch
          %206 = sbr.rel (%p204) target = $region44
        $region43: #{tpu_custom_call.1} parent=39 // pred_region
          %207 = dma.done [#allocation3], 128
        $region44: #{tpu_custom_call.1} parent=39 // pred_fallthru
          _
        %p208 = scmp.lt.s32.totalorder %s20, 1
        %s209 = scalar_select %p208, %s20, 1
        %s210 = smul.addr %s209, 4
        %s211 = scalar_lea.vmem %s0, %s210
        %p212 = pneg %p41
        %p213 = pneg %p38
        %p214 = pneg %p62
        %p215 = pneg %p59
        %p216 = pneg %p83
        %p217 = pneg %p80
        %p218 = pneg %p104
        %p219 = pneg %p101
        %p220 = pneg %p125
        %p221 = pneg %p122
        %p222 = pneg %p151
        %p223 = pneg %p148
        %s224 = sand.u32 %s138, 1
        %s225 = scalar_lea.sflag [#allocation4], %s224
        %s226 = sand.u32 %s138, 1
        %s227 = smul.addr %s226, 8
        %s228 = scalar_lea.vmem [#allocation5], %s227
        %p229 = scmp.lt.s32.totalorder %s20, 1
        %s230 = scalar_select %p229, %s20, 1
        %s231 = smul.addr %s230, 4
        %s232 = scalar_lea.vmem %s0, %s231
        %v233 = vld [vmem:[%s1] sm:$0xff]
        %v234 = vld [vmem:[#allocation2] sm:$0xff]
        %v235 = vld [vmem:[%s3] sm:$0xff]
        %v236 = vld [vmem:[%s4] sm:$0xff]
        %v237 = vld [vmem:[%s232] sm:$0xf]
        %239 = vset.pattern.permute.xlu0 0
        %240 = vperm.xlu0 %239, %v237
        %v241 = vpop.permute.xlu0 %240
        %243 = vset.pattern.permute.xlu0 15
        %244 = vperm.xlu0 %243, %v237
        %v245 = vpop.permute.xlu0 %244
        %247 = vrot.lane.b32.xlu0 %v237, 2
        %v248 = vpop.permute.xlu0 %247
        %vm250 = vcmask 15360
        %v251 = vsel %vm250, %v241, %v248
        %vm252 = vcmask 146432
        %v253 = vsel %vm252, %v251, %v245
        %v255 = vrot.slane %v253, 4
        %256 = vrot.lane.b32.xlu0 %v255, 127
        %v257 = vpop.permute.xlu0 %256
        %259 = vrot.lane.b32.xlu0 %v253, 126
        %v260 = vpop.permute.xlu0 %259
        %262 = vrot.lane.b32.xlu0 %v255, 125
        %v263 = vpop.permute.xlu0 %262
        %265 = vrot.lane.b32.xlu0 %v253, 124
        %v266 = vpop.permute.xlu0 %265
        %vm267 = vcmask 1043456
        %v268 = vsel %vm267, %v253, %v257
        %v269 = vsel %vm267, %v260, %v263
        %271 = vset.pattern.permute.xlu0 0
        %272 = vperm.xlu0 %271, %v235
        %v273 = vpop.permute.xlu0 %272
        %vm275 = vcmask 162816
        %v277 = vsel %vm275, %v233, 0
        %v279 = vsel %vm267, %v266, 0
        %281 = vmatprep.subr.mxu0 0.0
        %282 = vmatpush1.msra.mxu0 0.0
        %283 = vmatprep.subr.mxu0 0.0
        %284 = vmatpush1.msra.mxu0 0.0
        %285 = vmatprep.subr.mxu0 0.0
        %286 = vmatpush1.msra.mxu0 0.0
        %287 = vmatprep.subr.mxu0 0.0
        %288 = vmatpush1.msra.mxu0 0.0
        %289 = vmatprep.subr.mxu0 0.0
        %290 = vmatpush1.msra.mxu0 0.0
        %291 = vmatprep.subr.mxu0 0.0
        %292 = vmatpush1.msra.mxu0 0.0
        %293 = vmatprep.subr.mxu0 0.0
        %294 = vmatpush1.msra.mxu0 0.0
        %295 = vmatprep.subr.mxu0 0.0
        %296 = vmatpush1.msra.mxu0 0.0
        %297 = vmatprep.subr.mxu0 0.0
        %298 = vmatpush1.msra.mxu0 0.0
        %299 = vmatprep.subr.mxu0 0.0
        %300 = vmatpush1.msra.mxu0 0.0
        %301 = vmatprep.subr.mxu0 0.0
        %302 = vmatpush1.msra.mxu0 0.0
        %303 = vmatprep.subr.mxu0 0.0
        %304 = vmatpush1.msra.mxu0 0.0
        %305 = vmatprep.subr.mxu0 0.0
        %306 = vmatpush1.msra.mxu0 0.0
        %307 = vmatprep.subr.mxu0 0.0
        %308 = vmatpush1.msra.mxu0 %v279
        %309 = vmatprep.subr.mxu0 0.0
        %310 = vmatpush1.msra.mxu0 %v269
        %311 = vmatprep.subr.mxu0 0.0
        %312 = vmatpush1.msra.mxu0 %v268
        %313 = vmatprep.subr.mxu0 0.0
        %314 = vmatpush2.msra.mxu0 0.0
        %315 = vmatprep.subr.mxu0 0.0
        %316 = vmatpush2.msra.mxu0 0.0
        %317 = vmatprep.subr.mxu0 0.0
        %318 = vmatpush2.msra.mxu0 0.0
        %319 = vmatprep.subr.mxu0 0.0
        %320 = vmatpush2.msra.mxu0 0.0
        %321 = vmatprep.subr.mxu0 0.0
        %322 = vmatpush2.msra.mxu0 0.0
        %323 = vmatprep.subr.mxu0 0.0
        %324 = vmatpush2.msra.mxu0 0.0
        %325 = vmatprep.subr.mxu0 0.0
        %326 = vmatpush2.msra.mxu0 0.0
        %327 = vmatprep.subr.mxu0 0.0
        %328 = vmatpush2.msra.mxu0 0.0
        %329 = vmatprep.subr.mxu0 0.0
        %330 = vmatpush2.msra.mxu0 0.0
        %331 = vmatprep.subr.mxu0 0.0
        %332 = vmatpush2.msra.mxu0 0.0
        %333 = vmatprep.subr.mxu0 0.0
        %334 = vmatpush2.msra.mxu0 0.0
        %335 = vmatprep.subr.mxu0 0.0
        %336 = vmatpush2.msra.mxu0 0.0
        %337 = vmatprep.subr.mxu0 0.0
        %338 = vmatpush2.msra.mxu0 0.0
        %339 = vmatprep.subr.mxu0 0.0
        %340 = vmatpush2.msra.mxu0 0.0
        %341 = vmatprep.subr.mxu0 0.0
        %342 = vmatpush2.msra.mxu0 0.0
        %343 = vmatprep.subr.mxu0 0.0
        %344 = vmatpush2.msra.mxu0 0.0
        %345 = vmatprep.mubr.f32.mxu0 0.0
        %346 = vmatmul.mubr.f32.gmra.mxu0 %v277
        %v347 = vpop.f32.mrf.mxu0
        %v348 = vadd.f32 %v273, %v347
        %v349 = vpop.f32.mrf.mxu0
        %350 = vdwg.mxu0
        %v351 = vmax.f32 %v348, 0.0
        %353 = vset.pattern.permute.xlu0 0
        %354 = vperm.xlu0 %353, %v351
        %v355 = vpop.permute.xlu0 %354
        %357 = vset.pattern.permute.xlu0 15
        %358 = vperm.xlu0 %357, %v351
        %v359 = vpop.permute.xlu0 %358
        %361 = vrot.lane.b32.xlu0 %v351, 2
        %v362 = vpop.permute.xlu0 %361
        %v364 = vsel %vm250, %v355, %v362
        %v365 = vsel %vm252, %v364, %v359
        %367 = vrot.lane.b32.xlu0 %v365, 127
        %v368 = vpop.permute.xlu0 %367
        %370 = vrot.lane.b32.xlu0 %v365, 126
        %v371 = vpop.permute.xlu0 %370
        %373 = vrot.lane.b32.xlu0 %v365, 125
        %v374 = vpop.permute.xlu0 %373
        %376 = vrot.lane.b32.xlu0 %v365, 124
        %v377 = vpop.permute.xlu0 %376
        %380 = vset.pattern.permute.xlu0 0
        %381 = vperm.xlu0 %380, %v236
        %v382 = vpop.permute.xlu0 %381
        %vm384 = vcmask 359424
        %v386 = vsel %vm384, %v234, 0
        %v388 = vsel %vm267, %v260, 0
        %390 = vmatprep.subr.mxu0 0.0
        %391 = vmatpush1.msra.mxu0 0.0
        %392 = vmatprep.subr.mxu0 0.0
        %393 = vmatpush1.msra.mxu0 0.0
        %394 = vmatprep.subr.mxu0 0.0
        %395 = vmatpush1.msra.mxu0 0.0
        %396 = vmatprep.subr.mxu0 0.0
        %397 = vmatpush1.msra.mxu0 0.0
        %398 = vmatprep.subr.mxu0 0.0
        %399 = vmatpush1.msra.mxu0 0.0
        %400 = vmatprep.subr.mxu0 0.0
        %401 = vmatpush1.msra.mxu0 0.0
        %402 = vmatprep.subr.mxu0 0.0
        %403 = vmatpush1.msra.mxu0 0.0
        %404 = vmatprep.subr.mxu0 0.0
        %405 = vmatpush1.msra.mxu0 0.0
        %406 = vmatprep.subr.mxu0 0.0
        %407 = vmatpush1.msra.mxu0 0.0
        %408 = vmatprep.subr.mxu0 0.0
        %409 = vmatpush1.msra.mxu0 0.0
        %410 = vmatprep.subr.mxu0 0.0
        %411 = vmatpush1.msra.mxu0 %v388
        %412 = vmatprep.subr.mxu0 0.0
        %413 = vmatpush1.msra.mxu0 %v377
        %414 = vmatprep.subr.mxu0 0.0
        %415 = vmatpush1.msra.mxu0 %v374
        %416 = vmatprep.subr.mxu0 0.0
        %417 = vmatpush1.msra.mxu0 %v371
        %418 = vmatprep.subr.mxu0 0.0
        %419 = vmatpush1.msra.mxu0 %v368
        %420 = vmatprep.subr.mxu0 0.0
        %421 = vmatpush1.msra.mxu0 %v365
        %422 = vmatprep.subr.mxu0 0.0
        %423 = vmatpush2.msra.mxu0 0.0
        %424 = vmatprep.subr.mxu0 0.0
        %425 = vmatpush2.msra.mxu0 0.0
        %426 = vmatprep.subr.mxu0 0.0
        %427 = vmatpush2.msra.mxu0 0.0
        %428 = vmatprep.subr.mxu0 0.0
        %429 = vmatpush2.msra.mxu0 0.0
        %430 = vmatprep.subr.mxu0 0.0
        %431 = vmatpush2.msra.mxu0 0.0
        %432 = vmatprep.subr.mxu0 0.0
        %433 = vmatpush2.msra.mxu0 0.0
        %434 = vmatprep.subr.mxu0 0.0
        %435 = vmatpush2.msra.mxu0 0.0
        %436 = vmatprep.subr.mxu0 0.0
        %437 = vmatpush2.msra.mxu0 0.0
        %438 = vmatprep.subr.mxu0 0.0
        %439 = vmatpush2.msra.mxu0 0.0
        %440 = vmatprep.subr.mxu0 0.0
        %441 = vmatpush2.msra.mxu0 0.0
        %442 = vmatprep.subr.mxu0 0.0
        %443 = vmatpush2.msra.mxu0 0.0
        %444 = vmatprep.subr.mxu0 0.0
        %445 = vmatpush2.msra.mxu0 0.0
        %446 = vmatprep.subr.mxu0 0.0
        %447 = vmatpush2.msra.mxu0 0.0
        %448 = vmatprep.subr.mxu0 0.0
        %449 = vmatpush2.msra.mxu0 0.0
        %450 = vmatprep.subr.mxu0 0.0
        %451 = vmatpush2.msra.mxu0 0.0
        %452 = vmatprep.subr.mxu0 0.0
        %453 = vmatpush2.msra.mxu0 0.0
        %454 = vmatprep.mubr.f32.mxu0 0.0
        %455 = vmatmul.mubr.f32.gmra.mxu0 %v386
        %v456 = vpop.f32.mrf.mxu0
        %v457 = vadd.f32 %v382, %v456
        %v458 = vpop.f32.mrf.mxu0
        %459 = vdwg.mxu0
        %v460 = vmax.f32 %v457, 0.0
        %vm461 = vcmask 130048
        %462 = vst.msk [vmem:[%s228] sm:$0xff] %vm461, %v460
        %s463 = sand.u32 %s138, 1
        %s464 = scalar_lea.sflag [#allocation4], %s463
        %s465 = sand.u32 %s138, 1
        %s466 = smul.addr %s465, 8
        %s467 = scalar_lea.vmem [#allocation5], %s466
        // Predicated region
        $region45: #{tpu_custom_call.1} parent=39 // pred_check
          %p468 = pneg %p148
        $region46: #{tpu_custom_call.1} parent=39 // pred_check_branch
          %470 = sbr.rel (%p468) target = $region48
        $region47: #{tpu_custom_call.1} parent=39 // pred_region
          %s472 = ssub.s32 128, 128
          %473 = vsyncadd %s464, %s472
          %s474 = smul.addr %s20, 128
          %s475 = scalar_lea.hbm %s5, %s474
          %s477 = sshll.u32 %s467, 4
          %s478 = int_to_ptr.vmem [resolvable:$true] %s477
          %480 = dma.vmem_to_hbm [thread:$0]  %s478, 128, %s475, %s464
        $region48: #{tpu_custom_call.1} parent=39 // pred_fallthru
          _
      $region40: #{tpu_custom_call.1} parent=5 // pred_fallthru
        _
      %p481 = scmp.le.s32.totalorder 2, %s15
      // Predicated region
      $region49: #{tpu_custom_call.1} parent=5 // pred_check
        %p482 = pneg %p481
      $region50: #{tpu_custom_call.1} parent=5 // pred_check_branch
        %484 = sbr.rel (%p482) target = $region52
      $region51: #{tpu_custom_call.1} parent=5 // pred_region
        %s485 = ssub.s32 %s15, 2
        // Predicated region
        $region53: #{tpu_custom_call.1} parent=51 // pred_check
          %p486 = pneg %p154
        $region54: #{tpu_custom_call.1} parent=51 // pred_check_branch
          %488 = sbr.rel (%p486) target = $region56
        $region55: #{tpu_custom_call.1} parent=51 // pred_region
          %s489 = sand.u32 %s139, 1
          %s490 = scalar_lea.sflag [#allocation4], %s489
          %s491 = sand.u32 %s139, 1
          %s492 = smul.addr %s491, 8
          %s493 = scalar_lea.vmem [#allocation5], %s492
          %494 = dma.done %s490, 128
        $region56: #{tpu_custom_call.1} parent=51 // pred_fallthru
          _
      $region52: #{tpu_custom_call.1} parent=5 // pred_fallthru
        _
    $region6: #{tpu_custom_call.1} parent=1 // loop_footer
      %s19 = sadd.s32 1, %s15
    $region7: #{tpu_custom_call.1} parent=1 // loop_footer_branch
      %14 = sbr.rel target = $region3
    $region8: #{tpu_custom_call.1} parent=1 // loop_exit
      _
    %495 = vsyncpa [#allocation3], 1
    %s496 = scalar_lea.sflag [#allocation3], 1
    %497 = vsyncpa %s496, 1
    %498 = vsyncpa [#allocation4], 1
    %s499 = scalar_lea.sflag [#allocation4], 1
    %500 = vsyncpa %s499, 1

</llo_original>
